<compile_context>
chip_gen: v5e
topology: v5e:2x2
jax: 0.10.0
libtpu: 0.0.40
codegen_flags: <defaults>
</compile_context>

<pallas_src>
import jax
import jax.numpy as jnp
from jax.experimental import pallas as pl
from jax.experimental.pallas import tpu as pltpu


def actunit_kernel(i1_ref, i2_ref,
                   wa_ref, wc_ref, b1_ref,
                   w2_ref, b2_ref,
                   w3_ref, b3_ref,
                   o_ref):
    i1 = i1_ref[...]                      # stream dtype, kept for final multiply
    mm = wa_ref.dtype                     # bf16 (default) or f32 matmul operands
    i1m = i1.astype(mm)
    i2m = i2_ref[...].astype(mm)

    # Layer 1 (folded): concat([i1, i1-i2, i2]) @ W1 + b1
    h1 = (jnp.dot(i1m, wa_ref[...], preferred_element_type=jnp.float32)
          + jnp.dot(i2m, wc_ref[...], preferred_element_type=jnp.float32)
          + b1_ref[...])
    h1 = jnp.maximum(h1, 0.0)

    # Layer 2
    h2 = (jnp.dot(h1.astype(mm), w2_ref[...], preferred_element_type=jnp.float32)
          + b2_ref[...])
    h2 = jnp.maximum(h2, 0.0)

    # Layer 3: block-diagonal (G*32, G*D) weight both reduces to the per-row
    # score and broadcasts it over that row's D-lane group in one matmul.
    score = (jnp.dot(h2.astype(mm), w3_ref[...], preferred_element_type=jnp.float32)
             + b3_ref[...])

    o_ref[...] = (i1.astype(jnp.float32) * score).astype(o_ref.dtype)


def _block_diag(w, g):
    """(d_in, d_out) -> (g*d_in, g*d_out) with g copies of w on the diagonal."""
    if g == 1:
        return w
    d_in, d_out = w.shape
    eye = jnp.eye(g, dtype=w.dtype)
    return (eye[:, None, :, None] * w[None, :, None, :]).reshape(g * d_in, g * d_out)


def pack_params(params, d, *, matmul_dtype=jnp.bfloat16):
    """Pack ActUnit weights ONCE (outside the per-call hot path).

    Folds layer 1 algebraically, builds GxG block-diagonal copies for the
    lane-dense packed layout, and casts matmul weights to `matmul_dtype`
    (bf16 by default for native MXU rate; pass jnp.float32 for a
    full-precision fallback).  Biases stay f32 (added post-accumulation).
    Returns (g, packed_weight_tuple).
    """
    g = 128 // d if (d < 128 and 128 % d == 0) else 1
    w1, b1, w2, b2, w3, b3 = [p.astype(jnp.float32) for p in params]
    h1 = w1.shape[1]
    h2 = w2.shape[1]
    w1a, w1b, w1c = w1[:d], w1[d:2 * d], w1[2 * d:]
    wa = w1a + w1b            # multiplies i1   (fold done in f32)
    wc = w1c - w1b            # multiplies i2
    w3_bcast = jnp.broadcast_to(w3, (h2, d))   # reduce + broadcast score over D
    packed = (_block_diag(wa, g).astype(matmul_dtype),
              _block_diag(wc, g).astype(matmul_dtype),
              jnp.tile(b1.reshape(1, h1), (1, g)),
              _block_diag(w2, g).astype(matmul_dtype),
              jnp.tile(b2.reshape(1, h2), (1, g)),
              _block_diag(w3_bcast, g).astype(matmul_dtype),
              jnp.full((1, g * d), b3.reshape(())))
    return g, packed


def act_unit(i1, i2, packed, *, tile_rows=2048):
    """i1, i2: (..., D). Returns i1 * MLP(concat([i1, i1-i2, i2])) like ActUnit."""
    g, (wa, wc, b1, w2, b2, w3, b3) = packed
    orig_shape = i1.shape
    d = orig_shape[-1]
    lanes = g * d
    x1 = i1.reshape(-1, d)
    x2 = i2.reshape(-1, d)
    m = x1.shape[0]

    # Pad only to a multiple of g (<= g-1 rows) so rows fold into 128-lane
    # packed rows.  The last *grid* block overruns instead of padding to the
    # tile boundary: Pallas masks OOB output writes and rows are independent,
    # so garbage OOB reads only affect discarded rows.
    rem = (-m) % g
    if rem:
        x1 = jnp.pad(x1, ((0, rem), (0, 0)))
        x2 = jnp.pad(x2, ((0, rem), (0, 0)))
    mg = m + rem
    rows_p = mg // g
    x1p = x1.reshape(rows_p, lanes)          # free row-major reshape
    x2p = x2.reshape(rows_p, lanes)

    # ~1 MiB f32 stream blocks at tile_rows=2048 (past the ~85% HBM-roofline
    # point); multiple of 8 sublanes.
    tile_p = min(tile_rows, pl.cdiv(rows_p, 8) * 8)
    tile_p = max(8, (tile_p // 8) * 8)
    n_tiles = pl.cdiv(rows_p, tile_p)

    row_spec = pl.BlockSpec((tile_p, lanes), lambda i: (i, 0))

    def res_spec(a):                         # weights resident in VMEM
        return pl.BlockSpec(a.shape, lambda i: (0, 0))

    itemsize = jnp.dtype(x1.dtype).itemsize
    h1p = b1.shape[-1]                       # g*64
    h2p = b2.shape[-1]                       # g*32
    weight_bytes = sum(int(p.size) * jnp.dtype(p.dtype).itemsize
                       for p in (wa, wc, b1, w2, b2, w3, b3))
    exec_rows = n_tiles * tile_p             # executed packed rows (incl. overrun)
    cost = pl.CostEstimate(                  # block-diag-inflated (executed) dims
        flops=2 * exec_rows * (2 * lanes * h1p + h1p * h2p + h2p * lanes),
        transcendentals=0,
        bytes_accessed=3 * exec_rows * lanes * itemsize + weight_bytes,
    )

    out = pl.pallas_call(
        actunit_kernel,
        out_shape=jax.ShapeDtypeStruct((rows_p, lanes), x1.dtype),
        grid=(n_tiles,),
        in_specs=[row_spec, row_spec,
                  res_spec(wa), res_spec(wc), res_spec(b1),
                  res_spec(w2), res_spec(b2),
                  res_spec(w3), res_spec(b3)],
        out_specs=pl.BlockSpec((tile_p, lanes), lambda i: (i, 0)),
        compiler_params=pltpu.CompilerParams(
            dimension_semantics=("parallel",),
            vmem_limit_bytes=32 * 1024 * 1024),
        cost_estimate=cost,
    )(x1p, x2p, wa, wc, b1, w2, b2, w3, b3)

    out = out.reshape(mg, d)
    if rem:
        out = out[:m]
    return out.reshape(orig_shape)


def init_params(key, d):
    """nn.Linear-equivalent parameters, stored (in_features, out_features)."""
    ks = jax.random.split(key, 6)
    in_dim = 3 * d
    s1 = 1.0 / jnp.sqrt(1.0 * in_dim)
    s2 = 1.0 / jnp.sqrt(64.0)
    s3 = 1.0 / jnp.sqrt(32.0)
    w1 = jax.random.normal(ks[0], (in_dim, 64), jnp.float32) * s1
    b1 = jax.random.normal(ks[1], (64,), jnp.float32) * s1
    w2 = jax.random.normal(ks[2], (64, 32), jnp.float32) * s2
    b2 = jax.random.normal(ks[3], (32,), jnp.float32) * s2
    w3 = jax.random.normal(ks[4], (32, 1), jnp.float32) * s3
    b3 = jax.random.normal(ks[5], (1,), jnp.float32) * s3
    return (w1, b1, w2, b2, w3, b3)


def act_unit_ref(i1, i2, params):
    """Pure-JAX reference matching the PyTorch module exactly."""
    w1, b1, w2, b2, w3, b3 = params
    i3 = i1 - i2
    x = jnp.concatenate([i1, i3, i2], axis=-1)
    h1 = jnp.maximum(x @ w1 + b1, 0.0)
    h2 = jnp.maximum(h1 @ w2 + b2, 0.0)
    score = h2 @ w3 + b3
    return i1 * score


if __name__ == "__main__":
    B, T, D = 2, 8, 32            # MLP in_dim = 3*D = 96
    key = jax.random.PRNGKey(0)
    k1, k2, kp = jax.random.split(key, 3)

    i1 = jax.random.normal(k1, (B, T, D), jnp.float32)
    i2 = jax.random.normal(k2, (B, T, D), jnp.float32)
    params = init_params(kp, D)
    ref = act_unit_ref(i1, i2, params)

    # Default (perf) path: bf16 MXU operands, f32 accumulation / streams.
    packed_bf16 = pack_params(params, D)                       # pack ONCE
    out = jax.block_until_ready(act_unit(i1, i2, packed_bf16))
    assert out.shape == (B, T, D)
    err_bf16 = float(jnp.max(jnp.abs(out - ref)))
    assert jnp.allclose(out, ref, atol=1e-1, rtol=1e-1), err_bf16

    # Full-precision fallback path: tight tolerance anchor.
    packed_f32 = pack_params(params, D, matmul_dtype=jnp.float32)
    out_f32 = jax.block_until_ready(act_unit(i1, i2, packed_f32))
    err_f32 = float(jnp.max(jnp.abs(out_f32 - ref)))
    assert jnp.allclose(out_f32, ref, atol=1e-4, rtol=1e-4), err_f32

    print("KERNEL_OK")
</pallas_src>

<mosaic_0001>
module attributes {stable_mosaic.version = 11 : i64} {
  func.func @actunit_kernel(%arg0: i32, %arg1: memref<8x128xf32, #tpu.memory_space<vmem>>, %arg2: memref<8x128xf32, #tpu.memory_space<vmem>>, %arg3: memref<128x256xbf16, #tpu.memory_space<vmem>>, %arg4: memref<128x256xbf16, #tpu.memory_space<vmem>>, %arg5: memref<1x256xf32, #tpu.memory_space<vmem>>, %arg6: memref<256x128xbf16, #tpu.memory_space<vmem>>, %arg7: memref<1x128xf32, #tpu.memory_space<vmem>>, %arg8: memref<128x128xbf16, #tpu.memory_space<vmem>>, %arg9: memref<1x128xf32, #tpu.memory_space<vmem>>, %arg10: memref<8x128xf32, #tpu.memory_space<vmem>>) attributes {dimension_semantics = [#tpu.dimension_semantics<parallel>], iteration_bounds = array<i64: 1>, scalar_prefetch = 0 : i64, scratch_operands = 0 : i64, tpu.core_type = #tpu.core_type<tc>, window_params = [{transform_indices = @transform_0, window_bounds = array<i64: 8, 128>}, {transform_indices = @transform_1, window_bounds = array<i64: 8, 128>}, {pipeline_mode = #tpu.pipeline_mode<synchronous>, transform_indices = @transform_2, window_bounds = array<i64: 128, 256>}, {pipeline_mode = #tpu.pipeline_mode<synchronous>, transform_indices = @transform_3, window_bounds = array<i64: 128, 256>}, {pipeline_mode = #tpu.pipeline_mode<synchronous>, transform_indices = @transform_4, window_bounds = array<i64: 1, 256>}, {pipeline_mode = #tpu.pipeline_mode<synchronous>, transform_indices = @transform_5, window_bounds = array<i64: 256, 128>}, {pipeline_mode = #tpu.pipeline_mode<synchronous>, transform_indices = @transform_6, window_bounds = array<i64: 1, 128>}, {pipeline_mode = #tpu.pipeline_mode<synchronous>, transform_indices = @transform_7, window_bounds = array<i64: 128, 128>}, {pipeline_mode = #tpu.pipeline_mode<synchronous>, transform_indices = @transform_8, window_bounds = array<i64: 1, 128>}, {transform_indices = @transform_9, window_bounds = array<i64: 8, 128>}]} {
    %c0 = arith.constant 0 : index
    %c0_0 = arith.constant 0 : index
    %0 = vector.load %arg1[%c0, %c0_0] : memref<8x128xf32, #tpu.memory_space<vmem>>, vector<8x128xf32>
    %1 = arith.truncf %0 : vector<8x128xf32> to vector<8x128xbf16>
    %c0_1 = arith.constant 0 : index
    %c0_2 = arith.constant 0 : index
    %2 = vector.load %arg2[%c0_1, %c0_2] : memref<8x128xf32, #tpu.memory_space<vmem>>, vector<8x128xf32>
    %3 = arith.truncf %2 : vector<8x128xf32> to vector<8x128xbf16>
    %c0_3 = arith.constant 0 : index
    %c0_4 = arith.constant 0 : index
    %4 = vector.load %arg3[%c0_3, %c0_4] : memref<128x256xbf16, #tpu.memory_space<vmem>>, vector<128x256xbf16>
    %cst = arith.constant dense<0.000000e+00> : vector<8x256xf32>
    %5 = tpu.matmul %1, %4, %cst {dimension_numbers = #tpu.dot_dimension_numbers<[1], [0], [0], [1], [0, 0, 1, 1], [], []>} : vector<8x128xbf16>, vector<128x256xbf16>, vector<8x256xf32> -> vector<8x256xf32>
    %c0_5 = arith.constant 0 : index
    %c0_6 = arith.constant 0 : index
    %6 = vector.load %arg4[%c0_5, %c0_6] : memref<128x256xbf16, #tpu.memory_space<vmem>>, vector<128x256xbf16>
    %cst_7 = arith.constant dense<0.000000e+00> : vector<8x256xf32>
    %7 = tpu.matmul %3, %6, %cst_7 {dimension_numbers = #tpu.dot_dimension_numbers<[1], [0], [0], [1], [0, 0, 1, 1], [], []>} : vector<8x128xbf16>, vector<128x256xbf16>, vector<8x256xf32> -> vector<8x256xf32>
    %8 = arith.addf %5, %7 : vector<8x256xf32>
    %c0_8 = arith.constant 0 : index
    %c0_9 = arith.constant 0 : index
    %9 = vector.load %arg5[%c0_8, %c0_9] : memref<1x256xf32, #tpu.memory_space<vmem>>, vector<1x256xf32>
    %10 = vector.broadcast %9 : vector<1x256xf32> to vector<8x256xf32>
    %11 = arith.addf %8, %10 : vector<8x256xf32>
    %cst_10 = arith.constant 0.000000e+00 : f32
    %12 = vector.broadcast %cst_10 : f32 to vector<8x256xf32>
    %13 = arith.maximumf %11, %12 : vector<8x256xf32>
    %14 = arith.truncf %13 : vector<8x256xf32> to vector<8x256xbf16>
    %c0_11 = arith.constant 0 : index
    %c0_12 = arith.constant 0 : index
    %15 = vector.load %arg6[%c0_11, %c0_12] : memref<256x128xbf16, #tpu.memory_space<vmem>>, vector<256x128xbf16>
    %cst_13 = arith.constant dense<0.000000e+00> : vector<8x128xf32>
    %16 = tpu.matmul %14, %15, %cst_13 {dimension_numbers = #tpu.dot_dimension_numbers<[1], [0], [0], [1], [0, 0, 1, 1], [], []>} : vector<8x256xbf16>, vector<256x128xbf16>, vector<8x128xf32> -> vector<8x128xf32>
    %c0_14 = arith.constant 0 : index
    %c0_15 = arith.constant 0 : index
    %17 = vector.load %arg7[%c0_14, %c0_15] : memref<1x128xf32, #tpu.memory_space<vmem>>, vector<1x128xf32>
    %18 = vector.broadcast %17 : vector<1x128xf32> to vector<8x128xf32>
    %19 = arith.addf %16, %18 : vector<8x128xf32>
    %cst_16 = arith.constant 0.000000e+00 : f32
    %20 = vector.broadcast %cst_16 : f32 to vector<8x128xf32>
    %21 = arith.maximumf %19, %20 : vector<8x128xf32>
    %22 = arith.truncf %21 : vector<8x128xf32> to vector<8x128xbf16>
    %c0_17 = arith.constant 0 : index
    %c0_18 = arith.constant 0 : index
    %23 = vector.load %arg8[%c0_17, %c0_18] : memref<128x128xbf16, #tpu.memory_space<vmem>>, vector<128x128xbf16>
    %cst_19 = arith.constant dense<0.000000e+00> : vector<8x128xf32>
    %24 = tpu.matmul %22, %23, %cst_19 {dimension_numbers = #tpu.dot_dimension_numbers<[1], [0], [0], [1], [0, 0, 1, 1], [], []>} : vector<8x128xbf16>, vector<128x128xbf16>, vector<8x128xf32> -> vector<8x128xf32>
    %c0_20 = arith.constant 0 : index
    %c0_21 = arith.constant 0 : index
    %25 = vector.load %arg9[%c0_20, %c0_21] : memref<1x128xf32, #tpu.memory_space<vmem>>, vector<1x128xf32>
    %26 = vector.broadcast %25 : vector<1x128xf32> to vector<8x128xf32>
    %27 = arith.addf %24, %26 : vector<8x128xf32>
    %28 = arith.mulf %0, %27 : vector<8x128xf32>
    %c0_22 = arith.constant 0 : index
    %c0_23 = arith.constant 0 : index
    %29 = vector.load %arg10[%c0_22, %c0_23] : memref<8x128xf32, #tpu.memory_space<vmem>>, vector<8x128xf32>
    tpu.vector_store %arg10[%c0_22, %c0_23], %28 {strides = array<i32>} : memref<8x128xf32, #tpu.memory_space<vmem>>, vector<8x128xf32>,
    return
  }
  func.func @transform_0(%arg0: i32) -> (i32, i32) {
    %c0_i32 = arith.constant 0 : i32
    %c0_i32_0 = arith.constant 0 : i32
    return %arg0, %c0_i32 : i32, i32
  }
  func.func @transform_1(%arg0: i32) -> (i32, i32) {
    %c0_i32 = arith.constant 0 : i32
    %c0_i32_0 = arith.constant 0 : i32
    return %arg0, %c0_i32 : i32, i32
  }
  func.func @transform_2(%arg0: i32) -> (i32, i32) {
    %c0_i32 = arith.constant 0 : i32
    %c0_i32_0 = arith.constant 0 : i32
    %c0_i32_1 = arith.constant 0 : i32
    return %c0_i32, %c0_i32_0 : i32, i32
  }
  func.func @transform_3(%arg0: i32) -> (i32, i32) {
    %c0_i32 = arith.constant 0 : i32
    %c0_i32_0 = arith.constant 0 : i32
    %c0_i32_1 = arith.constant 0 : i32
    return %c0_i32, %c0_i32_0 : i32, i32
  }
  func.func @transform_4(%arg0: i32) -> (i32, i32) {
    %c0_i32 = arith.constant 0 : i32
    %c0_i32_0 = arith.constant 0 : i32
    %c0_i32_1 = arith.constant 0 : i32
    return %c0_i32, %c0_i32_0 : i32, i32
  }
  func.func @transform_5(%arg0: i32) -> (i32, i32) {
    %c0_i32 = arith.constant 0 : i32
    %c0_i32_0 = arith.constant 0 : i32
    %c0_i32_1 = arith.constant 0 : i32
    return %c0_i32, %c0_i32_0 : i32, i32
  }
  func.func @transform_6(%arg0: i32) -> (i32, i32) {
    %c0_i32 = arith.constant 0 : i32
    %c0_i32_0 = arith.constant 0 : i32
    %c0_i32_1 = arith.constant 0 : i32
    return %c0_i32, %c0_i32_0 : i32, i32
  }
  func.func @transform_7(%arg0: i32) -> (i32, i32) {
    %c0_i32 = arith.constant 0 : i32
    %c0_i32_0 = arith.constant 0 : i32
    %c0_i32_1 = arith.constant 0 : i32
    return %c0_i32, %c0_i32_0 : i32, i32
  }
  func.func @transform_8(%arg0: i32) -> (i32, i32) {
    %c0_i32 = arith.constant 0 : i32
    %c0_i32_0 = arith.constant 0 : i32
    %c0_i32_1 = arith.constant 0 : i32
    return %c0_i32, %c0_i32_0 : i32, i32
  }
  func.func @transform_9(%arg0: i32) -> (i32, i32) {
    %c0_i32 = arith.constant 0 : i32
    %c0_i32_0 = arith.constant 0 : i32
    return %arg0, %c0_i32 : i32, i32
  }
}

</mosaic_0001>

<llo_original>
// kernel: tpu_custom_call.1
$region0: #{tpu_custom_call.1}
  #allocation0 [shape = 'u32[]', space=smem, size = 0x4, offset = 0x4, fixed_abs, tag = 'smem constant byte address 0x4 - core index']
  #allocation1 [shape = 'u32[72,128]{1,0:T(1,128)}', space=vmem, size = 0x9000, scoped, tag = 'internal scratch']
  %s0 = inlined_call_operand.hbm [shape: f32[4,128], index: 0, kind: input, shape index: {}]
  %s1 = inlined_call_operand.hbm [shape: f32[4,128], index: 1, kind: input, shape index: {}]
  %s2 = inlined_call_operand.hbm [shape: bf16[128,256], index: 2, kind: input, shape index: {}]
  %s3 = inlined_call_operand.hbm [shape: bf16[128,256], index: 3, kind: input, shape index: {}]
  %s4 = inlined_call_operand.vmem [shape: f32[1,256], index: 4, kind: input, shape index: {}]
  %s5 = inlined_call_operand.hbm [shape: bf16[256,128], index: 5, kind: input, shape index: {}]
  %s6 = inlined_call_operand.vmem [shape: f32[1,128], index: 6, kind: input, shape index: {}]
  %s7 = inlined_call_operand.hbm [shape: bf16[128,128], index: 7, kind: input, shape index: {}]
  %s8 = inlined_call_operand.vmem [shape: f32[1,128], index: 8, kind: input, shape index: {}]
  %s9 = inlined_call_operand.hbm [shape: f32[4,128], index: 9, kind: output, shape index: {}]
  %s10 = sld [smem:[#allocation0]]
  $region70: #{tpu_custom_call.1} parent=0
    _
  %s12 = ssub.s32 1, %s10
  %s13 = scalar_select 0, %s12, %s10
  $region1: #{tpu_custom_call.1} parent=0
    #allocation2 [shape = 'u8[4096]{0}', space=vmem, size = 0x1000, scoped, tag = 'input window, operand 0, single buffered']
    #allocation3 [shape = 's32[1]{0}', space=sflag, size = 0x4, scoped, tag = 'scoped memory for tpu_custom_call.1']
    #allocation4 [shape = 's32[1]{0}', space=sflag, size = 0x4, scoped, tag = 'scoped memory for tpu_custom_call.1']
    #allocation5 [shape = 'u8[4096]{0}', space=vmem, size = 0x1000, scoped, tag = 'input window, operand 1, single buffered']
    #allocation6 [shape = 's32[1]{0}', space=sflag, size = 0x4, scoped, tag = 'scoped memory for tpu_custom_call.1']
    #allocation7 [shape = 'u8[65536]{0}', space=vmem, size = 0x10000, scoped, tag = 'input window, operand 2, single buffered']
    #allocation8 [shape = 'u8[65536]{0}', space=vmem, size = 0x10000, scoped, tag = 'input window, operand 3, single buffered']
    #allocation9 [shape = 's32[1]{0}', space=sflag, size = 0x4, scoped, tag = 'scoped memory for tpu_custom_call.1']
    #allocation10 [shape = 'u8[65536]{0}', space=vmem, size = 0x10000, scoped, tag = 'input window, operand 5, single buffered']
    #allocation11 [shape = 'u8[32768]{0}', space=vmem, size = 0x8000, scoped, tag = 'input window, operand 7, single buffered']
    #allocation12 [shape = 's32[1]{0}', space=sflag, size = 0x4, scoped, tag = 'scoped memory for tpu_custom_call.1']
    #allocation13 [shape = 'u8[4096]{0}', space=vmem, size = 0x1000, scoped, tag = 'output window, operand 0, single buffered']
    %14 = vsyncpa [#allocation3], 0
    %15 = vsyncpa [#allocation6], 0
    %16 = vsyncpa [#allocation9], 0
    %17 = vsyncpa [#allocation12], 0
    %18 = vsyncpa [#allocation4], 0
    // Predicated region
    $region2: #{tpu_custom_call.1} parent=1 // pred_check
      _
    $region3: #{tpu_custom_call.1} parent=1 // pred_check_branch
      %20 = sbr.rel (0) target = $region5
    $region4: #{tpu_custom_call.1} parent=1 // pred_region
      %22 = vsyncadd [#allocation3], 64
      %s23 = sshll.u32 %s0, 4
      %s24 = int_to_ptr.hbm [resolvable:$true] %s23
      %s25 = sshll.u32 [#allocation2], 4
      %s26 = int_to_ptr.vmem [resolvable:$true] %s25
      %31 = dma.hbm_to_vmem [thread:$0]  %s24, 64, %s26, [#allocation3], 64, 64, 4
    $region5: #{tpu_custom_call.1} parent=1 // pred_fallthru
      _
    // Predicated region
    $region6: #{tpu_custom_call.1} parent=1 // pred_check
      _
    $region7: #{tpu_custom_call.1} parent=1 // pred_check_branch
      %33 = sbr.rel (0) target = $region9
    $region8: #{tpu_custom_call.1} parent=1 // pred_region
      %35 = vsyncadd [#allocation6], 64
      %s36 = sshll.u32 %s1, 4
      %s37 = int_to_ptr.hbm [resolvable:$true] %s36
      %s38 = sshll.u32 [#allocation5], 4
      %s39 = int_to_ptr.vmem [resolvable:$true] %s38
      %44 = dma.hbm_to_vmem [thread:$0]  %s37, 64, %s39, [#allocation6], 64, 64, 4
    $region9: #{tpu_custom_call.1} parent=1 // pred_fallthru
      _
    // Predicated region
    $region10: #{tpu_custom_call.1} parent=1 // pred_check
      _
    $region11: #{tpu_custom_call.1} parent=1 // pred_check_branch
      %46 = sbr.rel (0) target = $region13
    $region12: #{tpu_custom_call.1} parent=1 // pred_region
      %48 = vsyncadd [#allocation6], 0
      %s49 = sshll.u32 %s2, 4
      %s50 = int_to_ptr.hbm [resolvable:$true] %s49
      %s51 = sshll.u32 [#allocation7], 4
      %s52 = int_to_ptr.vmem [resolvable:$true] %s51
      %57 = dma.hbm_to_vmem [thread:$0]  %s50, 2048, %s52, [#allocation6], 128, 128, 8
    $region13: #{tpu_custom_call.1} parent=1 // pred_fallthru
      _
    // Predicated region
    $region14: #{tpu_custom_call.1} parent=1 // pred_check
      _
    $region15: #{tpu_custom_call.1} parent=1 // pred_check_branch
      %59 = sbr.rel (0) target = $region17
    $region16: #{tpu_custom_call.1} parent=1 // pred_region
      %61 = vsyncadd [#allocation9], 0
      %s62 = sshll.u32 %s3, 4
      %s63 = int_to_ptr.hbm [resolvable:$true] %s62
      %s64 = sshll.u32 [#allocation8], 4
      %s65 = int_to_ptr.vmem [resolvable:$true] %s64
      %70 = dma.hbm_to_vmem [thread:$0]  %s63, 2048, %s65, [#allocation9], 128, 128, 8
    $region17: #{tpu_custom_call.1} parent=1 // pred_fallthru
      _
    // Predicated region
    $region18: #{tpu_custom_call.1} parent=1 // pred_check
      _
    $region19: #{tpu_custom_call.1} parent=1 // pred_check_branch
      %72 = sbr.rel (0) target = $region21
    $region20: #{tpu_custom_call.1} parent=1 // pred_region
      _
    $region21: #{tpu_custom_call.1} parent=1 // pred_fallthru
      _
    // Predicated region
    $region22: #{tpu_custom_call.1} parent=1 // pred_check
      _
    $region23: #{tpu_custom_call.1} parent=1 // pred_check_branch
      %74 = sbr.rel (0) target = $region25
    $region24: #{tpu_custom_call.1} parent=1 // pred_region
      %76 = vsyncadd [#allocation9], 0
      %s77 = sshll.u32 %s5, 4
      %s78 = int_to_ptr.hbm [resolvable:$true] %s77
      %s79 = sshll.u32 [#allocation10], 4
      %s80 = int_to_ptr.vmem [resolvable:$true] %s79
      %85 = dma.hbm_to_vmem [thread:$0]  %s78, 2048, %s80, [#allocation9], 64, 64, 4
    $region25: #{tpu_custom_call.1} parent=1 // pred_fallthru
      _
    // Predicated region
    $region26: #{tpu_custom_call.1} parent=1 // pred_check
      _
    $region27: #{tpu_custom_call.1} parent=1 // pred_check_branch
      %87 = sbr.rel (0) target = $region29
    $region28: #{tpu_custom_call.1} parent=1 // pred_region
      _
    $region29: #{tpu_custom_call.1} parent=1 // pred_fallthru
      _
    // Predicated region
    $region30: #{tpu_custom_call.1} parent=1 // pred_check
      _
    $region31: #{tpu_custom_call.1} parent=1 // pred_check_branch
      %89 = sbr.rel (0) target = $region33
    $region32: #{tpu_custom_call.1} parent=1 // pred_region
      %91 = vsyncadd [#allocation12], 0
      %s92 = sshll.u32 %s7, 4
      %s93 = int_to_ptr.hbm [resolvable:$true] %s92
      %s94 = sshll.u32 [#allocation11], 4
      %s95 = int_to_ptr.vmem [resolvable:$true] %s94
      %100 = dma.hbm_to_vmem [thread:$0]  %s93, 1024, %s95, [#allocation12], 64, 64, 4
    $region33: #{tpu_custom_call.1} parent=1 // pred_fallthru
      _
    // Predicated region
    $region34: #{tpu_custom_call.1} parent=1 // pred_check
      _
    $region35: #{tpu_custom_call.1} parent=1 // pred_check_branch
      %102 = sbr.rel (0) target = $region37
    $region36: #{tpu_custom_call.1} parent=1 // pred_region
      _
    $region37: #{tpu_custom_call.1} parent=1 // pred_fallthru
      _
    // Predicated region
    $region38: #{tpu_custom_call.1} parent=1 // pred_check
      _
    $region39: #{tpu_custom_call.1} parent=1 // pred_check_branch
      %104 = sbr.rel (0) target = $region41
    $region40: #{tpu_custom_call.1} parent=1 // pred_region
      %106 = dma.done [#allocation3], 128
    $region41: #{tpu_custom_call.1} parent=1 // pred_fallthru
      _
    // Predicated region
    $region42: #{tpu_custom_call.1} parent=1 // pred_check
      _
    $region43: #{tpu_custom_call.1} parent=1 // pred_check_branch
      %108 = sbr.rel (0) target = $region45
    $region44: #{tpu_custom_call.1} parent=1 // pred_region
      %110 = dma.done [#allocation6], 128
    $region45: #{tpu_custom_call.1} parent=1 // pred_fallthru
      _
    // Predicated region
    $region46: #{tpu_custom_call.1} parent=1 // pred_check
      _
    $region47: #{tpu_custom_call.1} parent=1 // pred_check_branch
      %112 = sbr.rel (0) target = $region49
    $region48: #{tpu_custom_call.1} parent=1 // pred_region
      %114 = dma.done [#allocation6], 2048
    $region49: #{tpu_custom_call.1} parent=1 // pred_fallthru
      _
    // Predicated region
    $region50: #{tpu_custom_call.1} parent=1 // pred_check
      _
    $region51: #{tpu_custom_call.1} parent=1 // pred_check_branch
      %116 = sbr.rel (0) target = $region53
    $region52: #{tpu_custom_call.1} parent=1 // pred_region
      %118 = dma.done [#allocation9], 2048
    $region53: #{tpu_custom_call.1} parent=1 // pred_fallthru
      _
    // Predicated region
    $region54: #{tpu_custom_call.1} parent=1 // pred_check
      _
    $region55: #{tpu_custom_call.1} parent=1 // pred_check_branch
      %120 = sbr.rel (0) target = $region57
    $region56: #{tpu_custom_call.1} parent=1 // pred_region
      %122 = dma.done [#allocation9], 2048
    $region57: #{tpu_custom_call.1} parent=1 // pred_fallthru
      _
    // Predicated region
    $region58: #{tpu_custom_call.1} parent=1 // pred_check
      _
    $region59: #{tpu_custom_call.1} parent=1 // pred_check_branch
      %124 = sbr.rel (0) target = $region61
    $region60: #{tpu_custom_call.1} parent=1 // pred_region
      %126 = dma.done [#allocation12], 1024
    $region61: #{tpu_custom_call.1} parent=1 // pred_fallthru
      _
    %v127 = vld [vmem:[#allocation2] sm:$0xff]
    %v128 = vpack.c.bf16 %v127, %v127
    %v129 = vld [vmem:[#allocation5] sm:$0xff]
    %v130 = vpack.c.bf16 %v129, %v129
    %v131 = vld [vmem:[#allocation7] sm:$0xff]
    %v132 = vld [vmem:[#allocation7 + $0x8] sm:$0xff]
    %v133 = vld [vmem:[#allocation7 + $0x10] sm:$0xff]
    %v134 = vld [vmem:[#allocation7 + $0x18] sm:$0xff]
    %v135 = vld [vmem:[#allocation7 + $0x20] sm:$0xff]
    %v136 = vld [vmem:[#allocation7 + $0x28] sm:$0xff]
    %v137 = vld [vmem:[#allocation7 + $0x30] sm:$0xff]
    %v138 = vld [vmem:[#allocation7 + $0x38] sm:$0xff]
    %v139 = vld [vmem:[#allocation7 + $0x40] sm:$0xff]
    %v140 = vld [vmem:[#allocation7 + $0x48] sm:$0xff]
    %v141 = vld [vmem:[#allocation7 + $0x50] sm:$0xff]
    %v142 = vld [vmem:[#allocation7 + $0x58] sm:$0xff]
    %v143 = vld [vmem:[#allocation7 + $0x60] sm:$0xff]
    %v144 = vld [vmem:[#allocation7 + $0x68] sm:$0xff]
    %v145 = vld [vmem:[#allocation7 + $0x70] sm:$0xff]
    %v146 = vld [vmem:[#allocation7 + $0x78] sm:$0xff]
    %v147 = vld [vmem:[#allocation8] sm:$0xff]
    %v148 = vld [vmem:[#allocation8 + $0x8] sm:$0xff]
    %v149 = vld [vmem:[#allocation8 + $0x10] sm:$0xff]
    %v150 = vld [vmem:[#allocation8 + $0x18] sm:$0xff]
    %v151 = vld [vmem:[#allocation8 + $0x20] sm:$0xff]
    %v152 = vld [vmem:[#allocation8 + $0x28] sm:$0xff]
    %v153 = vld [vmem:[#allocation8 + $0x30] sm:$0xff]
    %v154 = vld [vmem:[#allocation8 + $0x38] sm:$0xff]
    %v155 = vld [vmem:[#allocation8 + $0x40] sm:$0xff]
    %v156 = vld [vmem:[#allocation8 + $0x48] sm:$0xff]
    %v157 = vld [vmem:[#allocation8 + $0x50] sm:$0xff]
    %v158 = vld [vmem:[#allocation8 + $0x58] sm:$0xff]
    %v159 = vld [vmem:[#allocation8 + $0x60] sm:$0xff]
    %v160 = vld [vmem:[#allocation8 + $0x68] sm:$0xff]
    %v161 = vld [vmem:[#allocation8 + $0x70] sm:$0xff]
    %v162 = vld [vmem:[#allocation8 + $0x78] sm:$0xff]
    %v179 = vunpack.c.l.b16 %v147
    %v180 = vunpack.c.h.b16 %v147
    %v181 = vunpack.c.l.b16 %v148
    %v182 = vunpack.c.h.b16 %v148
    %v183 = vunpack.c.l.b16 %v149
    %v184 = vunpack.c.h.b16 %v149
    %v185 = vunpack.c.l.b16 %v150
    %v186 = vunpack.c.h.b16 %v150
    %v187 = vunpack.c.l.b16 %v151
    %v188 = vunpack.c.h.b16 %v151
    %v189 = vunpack.c.l.b16 %v152
    %v190 = vunpack.c.h.b16 %v152
    %v191 = vunpack.c.l.b16 %v153
    %v192 = vunpack.c.h.b16 %v153
    %v193 = vunpack.c.l.b16 %v154
    %v194 = vunpack.c.h.b16 %v154
    %v195 = vunpack.c.l.b16 %v155
    %v196 = vunpack.c.h.b16 %v155
    %v197 = vunpack.c.l.b16 %v156
    %v198 = vunpack.c.h.b16 %v156
    %v199 = vunpack.c.l.b16 %v157
    %v200 = vunpack.c.h.b16 %v157
    %v201 = vunpack.c.l.b16 %v158
    %v202 = vunpack.c.h.b16 %v158
    %v203 = vunpack.c.l.b16 %v159
    %v204 = vunpack.c.h.b16 %v159
    %v205 = vunpack.c.l.b16 %v160
    %v206 = vunpack.c.h.b16 %v160
    %v207 = vunpack.c.l.b16 %v161
    %v208 = vunpack.c.h.b16 %v161
    %v209 = vunpack.c.l.b16 %v162
    %v210 = vunpack.c.h.b16 %v162
    %v211 = vpack.c.b16 %v181, %v179
    %v212 = vpack.c.b16 %v182, %v180
    %v213 = vpack.c.b16 %v185, %v183
    %v214 = vpack.c.b16 %v186, %v184
    %v215 = vpack.c.b16 %v189, %v187
    %v216 = vpack.c.b16 %v190, %v188
    %v217 = vpack.c.b16 %v193, %v191
    %v218 = vpack.c.b16 %v194, %v192
    %v219 = vpack.c.b16 %v197, %v195
    %v220 = vpack.c.b16 %v198, %v196
    %v221 = vpack.c.b16 %v201, %v199
    %v222 = vpack.c.b16 %v202, %v200
    %v223 = vpack.c.b16 %v205, %v203
    %v224 = vpack.c.b16 %v206, %v204
    %v225 = vpack.c.b16 %v209, %v207
    %v226 = vpack.c.b16 %v210, %v208
    %243 = vmatpush.bf16.msra.mxu0 %v225
    %244 = vmatpush.bf16.msra.mxu0 %v223
    %245 = vmatpush.bf16.msra.mxu0 %v221
    %246 = vmatpush.bf16.msra.mxu0 %v219
    %247 = vmatpush.bf16.msra.mxu0 %v217
    %248 = vmatpush.bf16.msra.mxu0 %v215
    %249 = vmatpush.bf16.msra.mxu0 %v213
    %250 = vmatpush.bf16.msra.mxu0 %v211
    %251 = vmatmul.bf16.gmra.mxu0 %v130
    %v252 = vpop.f32.mrf.mxu0
    %v253 = vadd.f32 0.0, %v252
    %v254 = vpop.f32.mrf.mxu0
    %255 = vdwg.mxu0
    %256 = vmatpush.bf16.msra.mxu0 %v226
    %257 = vmatpush.bf16.msra.mxu0 %v224
    %258 = vmatpush.bf16.msra.mxu0 %v222
    %259 = vmatpush.bf16.msra.mxu0 %v220
    %260 = vmatpush.bf16.msra.mxu0 %v218
    %261 = vmatpush.bf16.msra.mxu0 %v216
    %262 = vmatpush.bf16.msra.mxu0 %v214
    %263 = vmatpush.bf16.msra.mxu0 %v212
    %264 = vmatmul.bf16.gmra.mxu0 %v130
    %v265 = vpop.f32.mrf.mxu0
    %v266 = vadd.f32 0.0, %v265
    %v267 = vpop.f32.mrf.mxu0
    %268 = vdwg.mxu0
    %v285 = vunpack.c.l.b16 %v131
    %v286 = vunpack.c.h.b16 %v131
    %v287 = vunpack.c.l.b16 %v132
    %v288 = vunpack.c.h.b16 %v132
    %v289 = vunpack.c.l.b16 %v133
    %v290 = vunpack.c.h.b16 %v133
    %v291 = vunpack.c.l.b16 %v134
    %v292 = vunpack.c.h.b16 %v134
    %v293 = vunpack.c.l.b16 %v135
    %v294 = vunpack.c.h.b16 %v135
    %v295 = vunpack.c.l.b16 %v136
    %v296 = vunpack.c.h.b16 %v136
    %v297 = vunpack.c.l.b16 %v137
    %v298 = vunpack.c.h.b16 %v137
    %v299 = vunpack.c.l.b16 %v138
    %v300 = vunpack.c.h.b16 %v138
    %v301 = vunpack.c.l.b16 %v139
    %v302 = vunpack.c.h.b16 %v139
    %v303 = vunpack.c.l.b16 %v140
    %v304 = vunpack.c.h.b16 %v140
    %v305 = vunpack.c.l.b16 %v141
    %v306 = vunpack.c.h.b16 %v141
    %v307 = vunpack.c.l.b16 %v142
    %v308 = vunpack.c.h.b16 %v142
    %v309 = vunpack.c.l.b16 %v143
    %v310 = vunpack.c.h.b16 %v143
    %v311 = vunpack.c.l.b16 %v144
    %v312 = vunpack.c.h.b16 %v144
    %v313 = vunpack.c.l.b16 %v145
    %v314 = vunpack.c.h.b16 %v145
    %v315 = vunpack.c.l.b16 %v146
    %v316 = vunpack.c.h.b16 %v146
    %v317 = vpack.c.b16 %v287, %v285
    %v318 = vpack.c.b16 %v288, %v286
    %v319 = vpack.c.b16 %v291, %v289
    %v320 = vpack.c.b16 %v292, %v290
    %v321 = vpack.c.b16 %v295, %v293
    %v322 = vpack.c.b16 %v296, %v294
    %v323 = vpack.c.b16 %v299, %v297
    %v324 = vpack.c.b16 %v300, %v298
    %v325 = vpack.c.b16 %v303, %v301
    %v326 = vpack.c.b16 %v304, %v302
    %v327 = vpack.c.b16 %v307, %v305
    %v328 = vpack.c.b16 %v308, %v306
    %v329 = vpack.c.b16 %v311, %v309
    %v330 = vpack.c.b16 %v312, %v310
    %v331 = vpack.c.b16 %v315, %v313
    %v332 = vpack.c.b16 %v316, %v314
    %349 = vmatpush.bf16.msra.mxu0 %v331
    %350 = vmatpush.bf16.msra.mxu0 %v329
    %351 = vmatpush.bf16.msra.mxu0 %v327
    %352 = vmatpush.bf16.msra.mxu0 %v325
    %353 = vmatpush.bf16.msra.mxu0 %v323
    %354 = vmatpush.bf16.msra.mxu0 %v321
    %355 = vmatpush.bf16.msra.mxu0 %v319
    %356 = vmatpush.bf16.msra.mxu0 %v317
    %357 = vmatmul.bf16.gmra.mxu0 %v128
    %v358 = vpop.f32.mrf.mxu0
    %v359 = vadd.f32 %v253, %v358
    %v360 = vpop.f32.mrf.mxu0
    %361 = vdwg.mxu0
    %362 = vmatpush.bf16.msra.mxu0 %v332
    %363 = vmatpush.bf16.msra.mxu0 %v330
    %364 = vmatpush.bf16.msra.mxu0 %v328
    %365 = vmatpush.bf16.msra.mxu0 %v326
    %366 = vmatpush.bf16.msra.mxu0 %v324
    %367 = vmatpush.bf16.msra.mxu0 %v322
    %368 = vmatpush.bf16.msra.mxu0 %v320
    %369 = vmatpush.bf16.msra.mxu0 %v318
    %370 = vmatmul.bf16.gmra.mxu0 %v128
    %v371 = vpop.f32.mrf.mxu0
    %v372 = vadd.f32 %v266, %v371
    %v373 = vpop.f32.mrf.mxu0
    %374 = vdwg.mxu0
    %v375 = vld [vmem:[%s4] sm:$0x3]
    %v377 = vperm.slane %v375, 0
    %v378 = vperm.slane %v375, 1
    %v381 = vadd.f32 %v359, %v377
    %v382 = vadd.f32 %v372, %v378
    %v383 = vmax.f32 %v381, 0.0
    %v384 = vmax.f32 %v382, 0.0
    %v385 = vpack.c.bf16 %v383, %v383
    %v386 = vpack.c.bf16 %v384, %v384
    %v387 = vld [vmem:[#allocation10] sm:$0xf]
    %v388 = vld [vmem:[#allocation10 + $0x4] sm:$0xf]
    %v389 = vld [vmem:[#allocation10 + $0x8] sm:$0xf]
    %v390 = vld [vmem:[#allocation10 + $0xc] sm:$0xf]
    %v391 = vld [vmem:[#allocation10 + $0x10] sm:$0xf]
    %v392 = vld [vmem:[#allocation10 + $0x14] sm:$0xf]
    %v393 = vld [vmem:[#allocation10 + $0x18] sm:$0xf]
    %v394 = vld [vmem:[#allocation10 + $0x1c] sm:$0xf]
    %v395 = vld [vmem:[#allocation10 + $0x20] sm:$0xf]
    %v396 = vld [vmem:[#allocation10 + $0x24] sm:$0xf]
    %v397 = vld [vmem:[#allocation10 + $0x28] sm:$0xf]
    %v398 = vld [vmem:[#allocation10 + $0x2c] sm:$0xf]
    %v399 = vld [vmem:[#allocation10 + $0x30] sm:$0xf]
    %v400 = vld [vmem:[#allocation10 + $0x34] sm:$0xf]
    %v401 = vld [vmem:[#allocation10 + $0x38] sm:$0xf]
    %v402 = vld [vmem:[#allocation10 + $0x3c] sm:$0xf]
    %v403 = vld [vmem:[#allocation10 + $0x40] sm:$0xf]
    %v404 = vld [vmem:[#allocation10 + $0x44] sm:$0xf]
    %v405 = vld [vmem:[#allocation10 + $0x48] sm:$0xf]
    %v406 = vld [vmem:[#allocation10 + $0x4c] sm:$0xf]
    %v407 = vld [vmem:[#allocation10 + $0x50] sm:$0xf]
    %v408 = vld [vmem:[#allocation10 + $0x54] sm:$0xf]
    %v409 = vld [vmem:[#allocation10 + $0x58] sm:$0xf]
    %v410 = vld [vmem:[#allocation10 + $0x5c] sm:$0xf]
    %v411 = vld [vmem:[#allocation10 + $0x60] sm:$0xf]
    %v412 = vld [vmem:[#allocation10 + $0x64] sm:$0xf]
    %v413 = vld [vmem:[#allocation10 + $0x68] sm:$0xf]
    %v414 = vld [vmem:[#allocation10 + $0x6c] sm:$0xf]
    %v415 = vld [vmem:[#allocation10 + $0x70] sm:$0xf]
    %v416 = vld [vmem:[#allocation10 + $0x74] sm:$0xf]
    %v417 = vld [vmem:[#allocation10 + $0x78] sm:$0xf]
    %v418 = vld [vmem:[#allocation10 + $0x7c] sm:$0xf]
    %v419 = vld [vmem:[%s6] sm:$0x1]
    %v421 = vperm.slane %v419, 0
    %v455 = vunpack.c.l.b16 %v387
    %v456 = vunpack.c.l.b16 %v388
    %v457 = vunpack.c.l.b16 %v389
    %v458 = vunpack.c.l.b16 %v390
    %v459 = vunpack.c.l.b16 %v391
    %v460 = vunpack.c.l.b16 %v392
    %v461 = vunpack.c.l.b16 %v393
    %v462 = vunpack.c.l.b16 %v394
    %v463 = vunpack.c.l.b16 %v395
    %v464 = vunpack.c.l.b16 %v396
    %v465 = vunpack.c.l.b16 %v397
    %v466 = vunpack.c.l.b16 %v398
    %v467 = vunpack.c.l.b16 %v399
    %v468 = vunpack.c.l.b16 %v400
    %v469 = vunpack.c.l.b16 %v401
    %v470 = vunpack.c.l.b16 %v402
    %v471 = vunpack.c.l.b16 %v403
    %v472 = vunpack.c.l.b16 %v404
    %v473 = vunpack.c.l.b16 %v405
    %v474 = vunpack.c.l.b16 %v406
    %v475 = vunpack.c.l.b16 %v407
    %v476 = vunpack.c.l.b16 %v408
    %v477 = vunpack.c.l.b16 %v409
    %v478 = vunpack.c.l.b16 %v410
    %v479 = vunpack.c.l.b16 %v411
    %v480 = vunpack.c.l.b16 %v412
    %v481 = vunpack.c.l.b16 %v413
    %v482 = vunpack.c.l.b16 %v414
    %v483 = vunpack.c.l.b16 %v415
    %v484 = vunpack.c.l.b16 %v416
    %v485 = vunpack.c.l.b16 %v417
    %v486 = vunpack.c.l.b16 %v418
    %v487 = vpack.c.b16 %v456, %v455
    %v488 = vpack.c.b16 %v458, %v457
    %v489 = vpack.c.b16 %v460, %v459
    %v490 = vpack.c.b16 %v462, %v461
    %v491 = vpack.c.b16 %v464, %v463
    %v492 = vpack.c.b16 %v466, %v465
    %v493 = vpack.c.b16 %v468, %v467
    %v494 = vpack.c.b16 %v470, %v469
    %v495 = vpack.c.b16 %v472, %v471
    %v496 = vpack.c.b16 %v474, %v473
    %v497 = vpack.c.b16 %v476, %v475
    %v498 = vpack.c.b16 %v478, %v477
    %v499 = vpack.c.b16 %v480, %v479
    %v500 = vpack.c.b16 %v482, %v481
    %v501 = vpack.c.b16 %v484, %v483
    %v502 = vpack.c.b16 %v486, %v485
    %519 = vmatpush.bf16.msra.mxu0 %v494
    %520 = vmatpush.bf16.msra.mxu0 %v493
    %521 = vmatpush.bf16.msra.mxu0 %v492
    %522 = vmatpush.bf16.msra.mxu0 %v491
    %523 = vmatpush.bf16.msra.mxu0 %v490
    %524 = vmatpush.bf16.msra.mxu0 %v489
    %525 = vmatpush.bf16.msra.mxu0 %v488
    %526 = vmatpush.bf16.msra.mxu0 %v487
    %527 = vmatmul.bf16.gmra.mxu0 %v385
    %v528 = vpop.f32.mrf.mxu0
    %v529 = vadd.f32 %v421, %v528
    %v530 = vpop.f32.mrf.mxu0
    %531 = vdwg.mxu0
    %532 = vmatpush.bf16.msra.mxu0 %v502
    %533 = vmatpush.bf16.msra.mxu0 %v501
    %534 = vmatpush.bf16.msra.mxu0 %v500
    %535 = vmatpush.bf16.msra.mxu0 %v499
    %536 = vmatpush.bf16.msra.mxu0 %v498
    %537 = vmatpush.bf16.msra.mxu0 %v497
    %538 = vmatpush.bf16.msra.mxu0 %v496
    %539 = vmatpush.bf16.msra.mxu0 %v495
    %540 = vmatmul.bf16.gmra.mxu0 %v386
    %v541 = vpop.f32.mrf.mxu0
    %v542 = vadd.f32 %v529, %v541
    %v543 = vpop.f32.mrf.mxu0
    %544 = vdwg.mxu0
    %v545 = vmax.f32 %v542, 0.0
    %v546 = vpack.c.bf16 %v545, %v545
    %v547 = vld [vmem:[#allocation11] sm:$0xf]
    %v548 = vld [vmem:[#allocation11 + $0x4] sm:$0xf]
    %v549 = vld [vmem:[#allocation11 + $0x8] sm:$0xf]
    %v550 = vld [vmem:[#allocation11 + $0xc] sm:$0xf]
    %v551 = vld [vmem:[#allocation11 + $0x10] sm:$0xf]
    %v552 = vld [vmem:[#allocation11 + $0x14] sm:$0xf]
    %v553 = vld [vmem:[#allocation11 + $0x18] sm:$0xf]
    %v554 = vld [vmem:[#allocation11 + $0x1c] sm:$0xf]
    %v555 = vld [vmem:[#allocation11 + $0x20] sm:$0xf]
    %v556 = vld [vmem:[#allocation11 + $0x24] sm:$0xf]
    %v557 = vld [vmem:[#allocation11 + $0x28] sm:$0xf]
    %v558 = vld [vmem:[#allocation11 + $0x2c] sm:$0xf]
    %v559 = vld [vmem:[#allocation11 + $0x30] sm:$0xf]
    %v560 = vld [vmem:[#allocation11 + $0x34] sm:$0xf]
    %v561 = vld [vmem:[#allocation11 + $0x38] sm:$0xf]
    %v562 = vld [vmem:[#allocation11 + $0x3c] sm:$0xf]
    %v563 = vld [vmem:[%s8] sm:$0x1]
    %v565 = vperm.slane %v563, 0
    %v583 = vunpack.c.l.b16 %v547
    %v584 = vunpack.c.l.b16 %v548
    %v585 = vunpack.c.l.b16 %v549
    %v586 = vunpack.c.l.b16 %v550
    %v587 = vunpack.c.l.b16 %v551
    %v588 = vunpack.c.l.b16 %v552
    %v589 = vunpack.c.l.b16 %v553
    %v590 = vunpack.c.l.b16 %v554
    %v591 = vunpack.c.l.b16 %v555
    %v592 = vunpack.c.l.b16 %v556
    %v593 = vunpack.c.l.b16 %v557
    %v594 = vunpack.c.l.b16 %v558
    %v595 = vunpack.c.l.b16 %v559
    %v596 = vunpack.c.l.b16 %v560
    %v597 = vunpack.c.l.b16 %v561
    %v598 = vunpack.c.l.b16 %v562
    %v599 = vpack.c.b16 %v584, %v583
    %v600 = vpack.c.b16 %v586, %v585
    %v601 = vpack.c.b16 %v588, %v587
    %v602 = vpack.c.b16 %v590, %v589
    %v603 = vpack.c.b16 %v592, %v591
    %v604 = vpack.c.b16 %v594, %v593
    %v605 = vpack.c.b16 %v596, %v595
    %v606 = vpack.c.b16 %v598, %v597
    %615 = vmatpush.bf16.msra.mxu0 %v606
    %616 = vmatpush.bf16.msra.mxu0 %v605
    %617 = vmatpush.bf16.msra.mxu0 %v604
    %618 = vmatpush.bf16.msra.mxu0 %v603
    %619 = vmatpush.bf16.msra.mxu0 %v602
    %620 = vmatpush.bf16.msra.mxu0 %v601
    %621 = vmatpush.bf16.msra.mxu0 %v600
    %622 = vmatpush.bf16.msra.mxu0 %v599
    %623 = vmatmul.bf16.gmra.mxu0 %v546
    %v624 = vpop.f32.mrf.mxu0
    %v625 = vadd.f32 %v565, %v624
    %v626 = vpop.f32.mrf.mxu0
    %627 = vdwg.mxu0
    %v628 = vmul.f32 %v127, %v625
    %629 = vst [vmem:[#allocation13] sm:$0xff] %v628
    // Predicated region
    $region62: #{tpu_custom_call.1} parent=1 // pred_check
      _
    $region63: #{tpu_custom_call.1} parent=1 // pred_check_branch
      %631 = sbr.rel (0) target = $region65
    $region64: #{tpu_custom_call.1} parent=1 // pred_region
      %633 = vsyncadd [#allocation4], 64
      %s634 = sshll.u32 [#allocation13], 4
      %s635 = int_to_ptr.vmem [resolvable:$true] %s634
      %s636 = sshll.u32 %s9, 4
      %s637 = int_to_ptr.hbm [resolvable:$true] %s636
      %642 = dma.vmem_to_hbm [thread:$0]  %s635, 64, %s637, [#allocation4], 64, 64, 4
    $region65: #{tpu_custom_call.1} parent=1 // pred_fallthru
      _
    // Predicated region
    $region66: #{tpu_custom_call.1} parent=1 // pred_check
      _
    $region67: #{tpu_custom_call.1} parent=1 // pred_check_branch
      %644 = sbr.rel (0) target = $region69
    $region68: #{tpu_custom_call.1} parent=1 // pred_region
      %646 = dma.done [#allocation4], 128
    $region69: #{tpu_custom_call.1} parent=1 // pred_fallthru
      _
    %647 = vsyncpa [#allocation3], 1
    %648 = vsyncpa [#allocation6], 1
    %649 = vsyncpa [#allocation9], 1
    %650 = vsyncpa [#allocation12], 1
    %651 = vsyncpa [#allocation4], 1

</llo_original>
